<compile_context>
chip_gen: v7x
topology: tpu7x:2x2x1
jax: 0.10.0
libtpu: 0.0.40
codegen_flags: <defaults>
</compile_context>

<pallas_src>
import math
import functools

import jax
import jax.numpy as jnp
from jax import lax
from jax.experimental import pallas as pl
from jax.experimental.pallas import tpu as pltpu


# ----------------------------- Pallas kernel ------------------------------- #
def _egp_logits_kernel(q_ref, kt_ref, rb_ref, cb_ref, out_ref, *,
                       q_tile, tril_mask):
    """One (batch, head, query-tile) step.

    q_ref : (1, TQ, hd)   rotated queries, 1/sqrt(hd) pre-folded (compute dtype)
    kt_ref: (1, hd, S_k)  rotated keys, pre-transposed              (compute dtype)
    rb_ref: (1, 1, TQ, 1) per-head row bias (f32)
    cb_ref: (1, 1, 1, S_k) per-head col bias (f32)
    out_ref: (1, 1, TQ, S_k)
    """
    # Single fused K=hd MXU matmul (f32 accumulation).
    base = jnp.dot(q_ref[0], kt_ref[0], preferred_element_type=jnp.float32)

    logits = base + rb_ref[0, 0] + cb_ref[0, 0]

    if tril_mask:
        tq, sk = logits.shape
        row = (pl.program_id(2) * q_tile
               + lax.broadcasted_iota(jnp.int32, (tq, 1), 0))
        col = lax.broadcasted_iota(jnp.int32, (1, sk), 1)
        logits = jnp.where(row > col, logits - jnp.float32(1e12), logits)

    out_ref[0, 0] = logits.astype(out_ref.dtype)


# ------------------------------- helpers ------------------------------------ #
def _round_up(n, m):
    return ((n + m - 1) // m) * m


def _pad_axis(a, axis, target):
    pad = target - a.shape[axis]
    if pad <= 0:
        return a
    widths = [(0, 0)] * a.ndim
    widths[axis] = (0, pad)
    return jnp.pad(a, widths)


def _vmem_limit_bytes():
    """Generation-aware VMEM limit: ~3/4 of physical, capped at 64 MiB."""
    cap = 64 * 1024 * 1024  # v7x physical size; conservative fallback
    try:
        info = pltpu.get_tpu_info()
        cap = int(getattr(info, "vmem_capacity_bytes", cap))
    except Exception:
        pass
    return int(min(cap * 3 // 4, 64 * 1024 * 1024))


# ------------------------------- wrapper ------------------------------------ #
def efficient_global_pointer(x, params, *, heads, head_size, tril_mask=True,
                             compute_dtype=jnp.bfloat16,
                             out_dtype=jnp.float32):
    """x: (B, S, H) float32.  Returns (B, heads, S, S) in out_dtype.

    compute_dtype: dtype of the MXU operands (bf16 = native MXU path, ~1e-3
    relative error; f32 matches the fp32 reference to ~1e-4).
    out_dtype: dtype of the logits written to HBM (the kernel is HBM-write
    bound, so bf16 output roughly halves wall clock on v5e/v6e).
    """
    B, S, H = x.shape
    wp, bp, wq, bq, cos_pos, sin_pos = params
    hd = head_size
    assert hd % 2 == 0, "head_size must be even for RoPE"
    assert cos_pos.shape[0] >= S and sin_pos.shape[0] >= S, \
        "RoPE tables (max_len) shorter than sequence length"
    # TODO(synk): padding `mask` argument of the PyTorch module not implemented.

    # ---------------- XLA prologue (done once, not heads*n_qt times) -------- #
    seq_out = x.astype(jnp.float32) @ wp + bp                    # (B, S, 2hd)
    qw, kw = seq_out[..., :hd], seq_out[..., hd:]
    cos = cos_pos[:S]
    sin = sin_pos[:S]

    def rope(v):
        v2 = jnp.stack([-v[..., 1::2], v[..., ::2]], axis=-1).reshape(v.shape)
        return v * cos + v2 * sin

    q_rot = rope(qw) * jnp.float32(1.0 / math.sqrt(hd))          # fold 1/sqrt(hd)
    k_rot = rope(kw)

    bias_in = seq_out @ wq + bq                                  # (B, S, 2*heads)
    row_bias = jnp.transpose(bias_in[..., 0::2], (0, 2, 1))[..., None]      # (B,heads,S,1)
    col_bias = jnp.transpose(bias_in[..., 1::2], (0, 2, 1))[:, :, None, :]  # (B,heads,1,S)

    # ------------------------- tiling decisions ----------------------------- #
    c_size = jnp.dtype(compute_dtype).itemsize
    o_size = jnp.dtype(out_dtype).itemsize
    S_k_pad = _round_up(S, 128)               # lane-dense output minor dim
    vmem_limit = _vmem_limit_bytes()

    def footprint(t):
        dbl = 2 * (S_k_pad * hd * c_size      # k_rot^T block (double-buffered)
                   + S_k_pad * 4              # col bias
                   + t * hd * c_size          # q tile
                   + t * 4                    # row bias
                   + t * S_k_pad * o_size)    # output tile
        return dbl + t * S_k_pad * 4          # in-kernel f32 logits temp

    q_tile = 16
    for t in (512, 256, 128, 64, 32, 16):
        if footprint(t) <= int(0.85 * vmem_limit):
            q_tile = t
            break
    # Only pad the query/row dim as far as needed (waste is linear, not
    # quadratic, in the padding); 16-row granularity keeps bf16 tiling happy.
    q_tile = max(16, min(q_tile, _round_up(S, 16)))
    S_q_pad = _round_up(S, q_tile)
    n_qt = S_q_pad // q_tile

    # ------------------------ pad + cast kernel inputs ---------------------- #
    q_p = _pad_axis(q_rot, 1, S_q_pad).astype(compute_dtype)           # (B,S_q,hd)
    kt_p = jnp.transpose(_pad_axis(k_rot, 1, S_k_pad),
                         (0, 2, 1)).astype(compute_dtype)              # (B,hd,S_k)
    rb_p = _pad_axis(row_bias, 2, S_q_pad)                             # (B,heads,S_q,1)
    cb_p = _pad_axis(col_bias, 3, S_k_pad)                             # (B,heads,1,S_k)

    steps = B * heads * n_qt
    cost = pl.CostEstimate(
        flops=int(2 * B * heads * S_q_pad * S_k_pad * hd),
        transcendentals=0,
        bytes_accessed=int(o_size * B * heads * S_q_pad * S_k_pad   # writes dominate
                           + c_size * steps * (q_tile + S_k_pad) * hd
                           + 4 * steps * (q_tile + S_k_pad)),
    )

    kernel = functools.partial(_egp_logits_kernel, q_tile=q_tile,
                               tril_mask=tril_mask)

    out_pad = pl.pallas_call(
        kernel,
        out_shape=jax.ShapeDtypeStruct((B, heads, S_q_pad, S_k_pad), out_dtype),
        grid_spec=pltpu.PrefetchScalarGridSpec(
            num_scalar_prefetch=0,
            grid=(B, heads, n_qt),
            in_specs=[
                pl.BlockSpec((1, q_tile, hd), lambda b, h, q: (b, q, 0)),        # q tile
                pl.BlockSpec((1, hd, S_k_pad), lambda b, h, q: (b, 0, 0)),       # k^T (all keys)
                pl.BlockSpec((1, 1, q_tile, 1), lambda b, h, q: (b, h, q, 0)),   # row bias
                pl.BlockSpec((1, 1, 1, S_k_pad), lambda b, h, q: (b, h, 0, 0)),  # col bias
            ],
            out_specs=pl.BlockSpec((1, 1, q_tile, S_k_pad),
                                   lambda b, h, q: (b, h, q, 0)),
        ),
        compiler_params=pltpu.CompilerParams(
            dimension_semantics=("parallel", "parallel", "parallel"),
            vmem_limit_bytes=vmem_limit),
        cost_estimate=cost,
    )(q_p, kt_p, rb_p, cb_p)

    if S_q_pad != S or S_k_pad != S:
        out_pad = out_pad[:, :, :S, :S]
    return out_pad


# -------------------------- parameter / table setup ------------------------- #
def make_rope_tables(max_len, head_size):
    position = jnp.arange(max_len, dtype=jnp.float32)[:, None]
    div_term = jnp.exp(jnp.arange(0, head_size, 2, dtype=jnp.float32)
                       * (-math.log(10000.0) / head_size))
    angles = position * div_term                              # (max_len, hd/2)
    cos_position = jnp.repeat(jnp.cos(angles), 2, axis=-1)    # (max_len, hd)
    sin_position = jnp.repeat(jnp.sin(angles), 2, axis=-1)    # (max_len, hd)
    return cos_position, sin_position


def init_params(key, hidden_size, heads, head_size, max_len):
    k1, k2, k3, k4 = jax.random.split(key, 4)
    wp = 0.02 * jax.random.normal(k1, (hidden_size, 2 * head_size), jnp.float32)
    bp = 0.02 * jax.random.normal(k2, (2 * head_size,), jnp.float32)
    wq = 0.02 * jax.random.normal(k3, (2 * head_size, 2 * heads), jnp.float32)
    bq = 0.02 * jax.random.normal(k4, (2 * heads,), jnp.float32)
    cos_pos, sin_pos = make_rope_tables(max_len, head_size)
    return wp, bp, wq, bq, cos_pos, sin_pos


# --------------------------- pure-JAX reference ------------------------------ #
def reference_forward(x, params, *, heads, head_size, tril_mask=True):
    wp, bp, wq, bq, cos_pos, sin_pos = params
    B, S, H = x.shape
    seq_out = x @ wp + bp                                           # (B,S,2hd)
    qw, kw = seq_out[..., :head_size], seq_out[..., head_size:]

    def rope(v):
        cos = cos_pos[:S]
        sin = sin_pos[:S]
        v2 = jnp.stack([-v[..., 1::2], v[..., ::2]], axis=-1).reshape(v.shape)
        return v * cos + v2 * sin

    qw, kw = rope(qw), rope(kw)
    logits = jnp.einsum('bmd,bnd->bmn', qw, kw) / math.sqrt(head_size)
    bias_input = seq_out @ wq + bq                                  # (B,S,2*heads)
    bias = bias_input.reshape(B, S, heads, 2).transpose(0, 2, 1, 3) # (B,heads,S,2)
    logits = logits[:, None] + bias[..., :1] + jnp.swapaxes(bias[..., 1:], 2, 3)
    if tril_mask:
        tril = jnp.tril(jnp.ones_like(logits), -1)
        logits = logits - tril * 1e12
    return logits


# ----------------------------------- main ------------------------------------ #
if __name__ == "__main__":
    B, S, H = 2, 8, 32
    heads, head_size, max_len = 4, 16, 512

    key = jax.random.PRNGKey(0)
    k_params, k_x = jax.random.split(key)
    params = init_params(k_params, H, heads, head_size, max_len)
    x = jax.random.normal(k_x, (B, S, H), jnp.float32)

    ref = reference_forward(x, params, heads=heads,
                            head_size=head_size, tril_mask=True)

    # f32 path: tight agreement with the fp32 reference.
    out_f32 = efficient_global_pointer(x, params, heads=heads,
                                       head_size=head_size, tril_mask=True,
                                       compute_dtype=jnp.float32,
                                       out_dtype=jnp.float32)
    out_f32 = jax.block_until_ready(out_f32)
    assert out_f32.shape == (B, heads, S, S)
    assert jnp.allclose(out_f32, ref, rtol=1e-4, atol=1e-4), "f32 path mismatch"

    # bf16 fast path: native MXU dtype + halved output HBM traffic.
    out_bf16 = efficient_global_pointer(x, params, heads=heads,
                                        head_size=head_size, tril_mask=True,
                                        compute_dtype=jnp.bfloat16,
                                        out_dtype=jnp.bfloat16)
    out_bf16 = jax.block_until_ready(out_bf16)
    assert out_bf16.shape == (B, heads, S, S)
    assert jnp.allclose(out_bf16.astype(jnp.float32), ref,
                        rtol=2e-2, atol=2e-3), "bf16 path mismatch"

    print("KERNEL_OK")
</pallas_src>

<mosaic_0001>
module attributes {stable_mosaic.version = 11 : i64} {
  func.func @_egp_logits_kernel(%arg0: i32, %arg1: i32, %arg2: i32, %arg3: memref<1x16x16xf32, #tpu.memory_space<vmem>>, %arg4: memref<1x16x128xf32, #tpu.memory_space<vmem>>, %arg5: memref<1x1x16x1xf32, #tpu.memory_space<vmem>>, %arg6: memref<1x1x1x128xf32, #tpu.memory_space<vmem>>, %arg7: memref<1x1x16x128xf32, #tpu.memory_space<vmem>>) attributes {dimension_semantics = [#tpu.dimension_semantics<parallel>, #tpu.dimension_semantics<parallel>, #tpu.dimension_semantics<parallel>], iteration_bounds = array<i64: 2, 4, 1>, scalar_prefetch = 0 : i64, scratch_operands = 0 : i64, tpu.core_type = #tpu.core_type<tc>, window_params = [{transform_indices = @transform_0, window_bounds = array<i64: 1, 16, 16>}, {transform_indices = @transform_1, window_bounds = array<i64: 1, 16, 128>}, {transform_indices = @transform_2, window_bounds = array<i64: 1, 1, 16, 1>}, {transform_indices = @transform_3, window_bounds = array<i64: 1, 1, 1, 128>}, {transform_indices = @transform_4, window_bounds = array<i64: 1, 1, 16, 128>}]} {
    %c0 = arith.constant 0 : index
    %c0_0 = arith.constant 0 : index
    %c0_1 = arith.constant 0 : index
    %0 = vector.load %arg3[%c0, %c0_0, %c0_1] : memref<1x16x16xf32, #tpu.memory_space<vmem>>, vector<1x16x16xf32>
    %1 = vector.shape_cast %0 : vector<1x16x16xf32> to vector<16x16xf32>
    %c0_2 = arith.constant 0 : index
    %c0_3 = arith.constant 0 : index
    %c0_4 = arith.constant 0 : index
    %2 = vector.load %arg4[%c0_2, %c0_3, %c0_4] : memref<1x16x128xf32, #tpu.memory_space<vmem>>, vector<1x16x128xf32>
    %3 = vector.shape_cast %2 : vector<1x16x128xf32> to vector<16x128xf32>
    %cst = arith.constant dense<0.000000e+00> : vector<16x128xf32>
    %4 = tpu.matmul %1, %3, %cst {dimension_numbers = #tpu.dot_dimension_numbers<[1], [0], [0], [1], [0, 0, 1, 1], [], []>} : vector<16x16xf32>, vector<16x128xf32>, vector<16x128xf32> -> vector<16x128xf32>
    %c0_5 = arith.constant 0 : index
    %c0_6 = arith.constant 0 : index
    %c0_7 = arith.constant 0 : index
    %c0_8 = arith.constant 0 : index
    %5 = vector.load %arg5[%c0_5, %c0_6, %c0_7, %c0_8] : memref<1x1x16x1xf32, #tpu.memory_space<vmem>>, vector<1x1x16x1xf32>
    %6 = vector.shape_cast %5 : vector<1x1x16x1xf32> to vector<16x1xf32>
    %7 = vector.broadcast %6 : vector<16x1xf32> to vector<16x128xf32>
    %8 = arith.addf %4, %7 : vector<16x128xf32>
    %c0_9 = arith.constant 0 : index
    %c0_10 = arith.constant 0 : index
    %c0_11 = arith.constant 0 : index
    %c0_12 = arith.constant 0 : index
    %9 = vector.load %arg6[%c0_9, %c0_10, %c0_11, %c0_12] : memref<1x1x1x128xf32, #tpu.memory_space<vmem>>, vector<1x1x1x128xf32>
    %10 = vector.shape_cast %9 : vector<1x1x1x128xf32> to vector<1x128xf32>
    %11 = vector.broadcast %10 : vector<1x128xf32> to vector<16x128xf32>
    %12 = arith.addf %8, %11 : vector<16x128xf32>
    %c16_i32 = arith.constant 16 : i32
    %13 = arith.muli %arg2, %c16_i32 : i32
    %14 = tpu.iota {dimensions = array<i32: 0>} : vector<16x1xi32>
    %15 = vector.broadcast %13 : i32 to vector<16x1xi32>
    %16 = arith.addi %15, %14 : vector<16x1xi32>
    %17 = tpu.iota {dimensions = array<i32: 1>} : vector<1x128xi32>
    %18 = vector.broadcast %16 : vector<16x1xi32> to vector<16x128xi32>
    %19 = vector.broadcast %17 : vector<1x128xi32> to vector<16x128xi32>
    %20 = arith.cmpi sgt, %18, %19 : vector<16x128xi32>
    %cst_13 = arith.constant 9.99999995E+11 : f32
    %21 = vector.broadcast %cst_13 : f32 to vector<16x128xf32>
    %22 = arith.subf %12, %21 : vector<16x128xf32>
    %23 = arith.select %20, %22, %12 : vector<16x128xi1>, vector<16x128xf32>
    %c0_14 = arith.constant 0 : index
    %c0_15 = arith.constant 0 : index
    %c0_16 = arith.constant 0 : index
    %c0_17 = arith.constant 0 : index
    %24 = vector.load %arg7[%c0_14, %c0_15, %c0_16, %c0_17] : memref<1x1x16x128xf32, #tpu.memory_space<vmem>>, vector<1x1x16x128xf32>
    %25 = vector.shape_cast %24 : vector<1x1x16x128xf32> to vector<16x128xf32>
    %26 = vector.shape_cast %23 : vector<16x128xf32> to vector<1x1x16x128xf32>
    tpu.vector_store %arg7[%c0_14, %c0_15, %c0_16, %c0_17], %26 {strides = array<i32>} : memref<1x1x16x128xf32, #tpu.memory_space<vmem>>, vector<1x1x16x128xf32>,
    return
  }
  func.func @transform_0(%arg0: i32, %arg1: i32, %arg2: i32) -> (i32, i32, i32) {
    %c0_i32 = arith.constant 0 : i32
    %c0_i32_0 = arith.constant 0 : i32
    return %arg0, %arg2, %c0_i32 : i32, i32, i32
  }
  func.func @transform_1(%arg0: i32, %arg1: i32, %arg2: i32) -> (i32, i32, i32) {
    %c0_i32 = arith.constant 0 : i32
    %c0_i32_0 = arith.constant 0 : i32
    %c0_i32_1 = arith.constant 0 : i32
    return %arg0, %c0_i32, %c0_i32_0 : i32, i32, i32
  }
  func.func @transform_2(%arg0: i32, %arg1: i32, %arg2: i32) -> (i32, i32, i32, i32) {
    %c0_i32 = arith.constant 0 : i32
    %c0_i32_0 = arith.constant 0 : i32
    return %arg0, %arg1, %arg2, %c0_i32 : i32, i32, i32, i32
  }
  func.func @transform_3(%arg0: i32, %arg1: i32, %arg2: i32) -> (i32, i32, i32, i32) {
    %c0_i32 = arith.constant 0 : i32
    %c0_i32_0 = arith.constant 0 : i32
    %c0_i32_1 = arith.constant 0 : i32
    return %arg0, %arg1, %c0_i32, %c0_i32_0 : i32, i32, i32, i32
  }
  func.func @transform_4(%arg0: i32, %arg1: i32, %arg2: i32) -> (i32, i32, i32, i32) {
    %c0_i32 = arith.constant 0 : i32
    %c0_i32_0 = arith.constant 0 : i32
    return %arg0, %arg1, %arg2, %c0_i32 : i32, i32, i32, i32
  }
}

</mosaic_0001>

<llo_original>
// kernel: tpu_custom_call.1
$region0: #{tpu_custom_call.1}
  #allocation0 [shape = 'u32[]', space=smem, size = 0x4, offset = 0x4, fixed_abs, tag = 'smem constant byte address 0x4 - core index']
  #allocation1 [shape = 'u32[144,128]{1,0:T(1,128)}', space=vmem, size = 0x12000, scoped, tag = 'internal scratch']
  %s0 = inlined_call_operand.vmem [shape: f32[2,16,16], index: 0, kind: input, shape index: {}]
  %s1 = inlined_call_operand.vmem [shape: f32[2,16,128], index: 1, kind: input, shape index: {}]
  %s2 = inlined_call_operand.vmem [shape: f32[2,4,16,1], index: 2, kind: input, shape index: {}]
  %s3 = inlined_call_operand.vmem [shape: f32[2,4,1,128], index: 3, kind: input, shape index: {}]
  %s4 = inlined_call_operand.hbm [shape: f32[2,4,16,128], index: 4, kind: output, shape index: {}]
  %s5 = sld [smem:[#allocation0]]
  $region49: #{tpu_custom_call.1} parent=0
    _
  %s7 = ssub.s32 1, %s5
  %s8 = scalar_select 0, %s7, %s5
  $region1: #{tpu_custom_call.1} parent=0
    #allocation2 [shape = 'u8[16384]{0}', space=vmem, size = 0x4000, scoped, tag = 'output window, operand 0']
    #allocation3 [shape = 's32[2]{0}', space=sflag, size = 0x8, scoped, tag = 'scoped memory for tpu_custom_call.1']
    %9 = vsyncpa [#allocation3], 0
    %s10 = scalar_lea.sflag [#allocation3], 1
    %11 = vsyncpa %s10, 0
    loop: start=0, step=1, limit=10
    $region2: #{tpu_custom_call.1} parent=1 // loop_pre_header
      _
    $region3: #{tpu_custom_call.1} parent=1 // loop_header
      %s13 = sphi 0, %s17
      %p14 = scmp.ge.s32.totalorder %s13, 10
      %s20 = sphi 0, %s39
      %s21 = sphi 0, %s35
      %s22 = sphi 0, %s31
      %s23 = sphi 0, %s20
      %s24 = sphi 0, %s21
      %s25 = sphi 0, %s22
      %s26 = sphi 0, %s23
      %s27 = sphi 0, %s24
      %s28 = sphi 0, %s25
      %s44 = sphi 0, %s46
      %s47 = sphi 0, %s44
      %s48 = sphi 0, %s47
      %s64 = sphi 0, %s48
      %s70 = sphi 0, %s72
      %s73 = sphi 0, %s70
      %s74 = sphi 0, %s73
      %s90 = sphi 0, %s74
      %s100 = sphi 0, %s102
      %s103 = sphi 0, %s100
      %s104 = sphi 0, %s103
      %s120 = sphi 0, %s104
      %s128 = sphi 0, %s130
      %s131 = sphi 0, %s128
      %s132 = sphi 0, %s131
      %s148 = sphi 0, %s132
      %s158 = sphi 0, %s160
      %s161 = sphi 0, %s158
      %s162 = sphi 0, %s161
      %s178 = sphi 0, %s162
    $region4: #{tpu_custom_call.1} parent=1 // loop_header_branch
      %16 = sbr.rel (%p14) target = $region8
    $region5: #{tpu_custom_call.1} parent=1 // loop_body
      %s18 = ssub.s32 %s13, 1
      %s19 = ssub.s32 %s13, 2
      %s29 = sadd.s32 1, %s22
      %p30 = scmp.ge.s32.totalorder %s29, 1
      %s31 = scalar_select %p30, 0, %s29
      %s32 = sadd.s32 1, %s21
      %s33 = scalar_select %p30, %s32, %s21
      %p34 = scmp.ge.s32.totalorder %s33, 4
      %s35 = scalar_select %p34, 0, %s33
      %s36 = sadd.s32 1, %s20
      %s37 = scalar_select %p34, %s36, %s20
      %p38 = scmp.ge.s32.totalorder %s37, 2
      %s39 = scalar_select %p38, 0, %s37
      %s40 = ssub.s32 %s20, %s39
      %s41 = ssub.s32 %s22, %s31
      %s42 = sor.u32 %s40, %s41
      %p43 = scmp.eq.s32.totalorder %s42, 0
      %s45 = sadd.s32 %s44, 1
      %s46 = scalar_select %p43, %s44, %s45
      %p49 = pneg %p43
      %p50 = scmp.eq.s32.totalorder %s13, 7
      %p51 = por %p49, %p50
      %p52 = scmp.ne.s32.totalorder %s44, %s47
      %p53 = scmp.eq.s32.totalorder %s13, 0
      %p54 = por %p52, %p53
      %p55 = scmp.ne.s32.totalorder %s44, %s47
      %p56 = scmp.eq.s32.totalorder %s18, 7
      %p57 = por %p55, %p56
      %p58 = scmp.ne.s32.totalorder %s47, %s48
      %p59 = scmp.eq.s32.totalorder %s18, 0
      %p60 = por %p58, %p59
      %p61 = scmp.ne.s32.totalorder %s47, %s48
      %p62 = scmp.eq.s32.totalorder %s19, 7
      %p63 = por %p61, %p62
      %p65 = scmp.ne.s32.totalorder %s48, %s64
      %p66 = scmp.eq.s32.totalorder %s19, 0
      %p67 = por %p65, %p66
      %s68 = ssub.s32 %s20, %s39
      %p69 = scmp.eq.s32.totalorder %s68, 0
      %s71 = sadd.s32 %s70, 1
      %s72 = scalar_select %p69, %s70, %s71
      %p75 = pneg %p69
      %p76 = scmp.eq.s32.totalorder %s13, 7
      %p77 = por %p75, %p76
      %p78 = scmp.ne.s32.totalorder %s70, %s73
      %p79 = scmp.eq.s32.totalorder %s13, 0
      %p80 = por %p78, %p79
      %p81 = scmp.ne.s32.totalorder %s70, %s73
      %p82 = scmp.eq.s32.totalorder %s18, 7
      %p83 = por %p81, %p82
      %p84 = scmp.ne.s32.totalorder %s73, %s74
      %p85 = scmp.eq.s32.totalorder %s18, 0
      %p86 = por %p84, %p85
      %p87 = scmp.ne.s32.totalorder %s73, %s74
      %p88 = scmp.eq.s32.totalorder %s19, 7
      %p89 = por %p87, %p88
      %p91 = scmp.ne.s32.totalorder %s74, %s90
      %p92 = scmp.eq.s32.totalorder %s19, 0
      %p93 = por %p91, %p92
      %s94 = ssub.s32 %s20, %s39
      %s95 = ssub.s32 %s21, %s35
      %s96 = sor.u32 %s94, %s95
      %s97 = ssub.s32 %s22, %s31
      %s98 = sor.u32 %s96, %s97
      %p99 = scmp.eq.s32.totalorder %s98, 0
      %s101 = sadd.s32 %s100, 1
      %s102 = scalar_select %p99, %s100, %s101
      %p105 = pneg %p99
      %p106 = scmp.eq.s32.totalorder %s13, 7
      %p107 = por %p105, %p106
      %p108 = scmp.ne.s32.totalorder %s100, %s103
      %p109 = scmp.eq.s32.totalorder %s13, 0
      %p110 = por %p108, %p109
      %p111 = scmp.ne.s32.totalorder %s100, %s103
      %p112 = scmp.eq.s32.totalorder %s18, 7
      %p113 = por %p111, %p112
      %p114 = scmp.ne.s32.totalorder %s103, %s104
      %p115 = scmp.eq.s32.totalorder %s18, 0
      %p116 = por %p114, %p115
      %p117 = scmp.ne.s32.totalorder %s103, %s104
      %p118 = scmp.eq.s32.totalorder %s19, 7
      %p119 = por %p117, %p118
      %p121 = scmp.ne.s32.totalorder %s104, %s120
      %p122 = scmp.eq.s32.totalorder %s19, 0
      %p123 = por %p121, %p122
      %s124 = ssub.s32 %s20, %s39
      %s125 = ssub.s32 %s21, %s35
      %s126 = sor.u32 %s124, %s125
      %p127 = scmp.eq.s32.totalorder %s126, 0
      %s129 = sadd.s32 %s128, 1
      %s130 = scalar_select %p127, %s128, %s129
      %p133 = pneg %p127
      %p134 = scmp.eq.s32.totalorder %s13, 7
      %p135 = por %p133, %p134
      %p136 = scmp.ne.s32.totalorder %s128, %s131
      %p137 = scmp.eq.s32.totalorder %s13, 0
      %p138 = por %p136, %p137
      %p139 = scmp.ne.s32.totalorder %s128, %s131
      %p140 = scmp.eq.s32.totalorder %s18, 7
      %p141 = por %p139, %p140
      %p142 = scmp.ne.s32.totalorder %s131, %s132
      %p143 = scmp.eq.s32.totalorder %s18, 0
      %p144 = por %p142, %p143
      %p145 = scmp.ne.s32.totalorder %s131, %s132
      %p146 = scmp.eq.s32.totalorder %s19, 7
      %p147 = por %p145, %p146
      %p149 = scmp.ne.s32.totalorder %s132, %s148
      %p150 = scmp.eq.s32.totalorder %s19, 0
      %p151 = por %p149, %p150
      %s152 = ssub.s32 %s20, %s39
      %s153 = ssub.s32 %s21, %s35
      %s154 = sor.u32 %s152, %s153
      %s155 = ssub.s32 %s22, %s31
      %s156 = sor.u32 %s154, %s155
      %p157 = scmp.eq.s32.totalorder %s156, 0
      %s159 = sadd.s32 %s158, 1
      %s160 = scalar_select %p157, %s158, %s159
      %p163 = pneg %p157
      %p164 = scmp.eq.s32.totalorder %s13, 7
      %p165 = por %p163, %p164
      %p166 = scmp.ne.s32.totalorder %s158, %s161
      %p167 = scmp.eq.s32.totalorder %s13, 0
      %p168 = por %p166, %p167
      %p169 = scmp.ne.s32.totalorder %s158, %s161
      %p170 = scmp.eq.s32.totalorder %s18, 7
      %p171 = por %p169, %p170
      %p172 = scmp.ne.s32.totalorder %s161, %s162
      %p173 = scmp.eq.s32.totalorder %s18, 0
      %p174 = por %p172, %p173
      %p175 = scmp.ne.s32.totalorder %s161, %s162
      %p176 = scmp.eq.s32.totalorder %s19, 7
      %p177 = por %p175, %p176
      %p179 = scmp.ne.s32.totalorder %s162, %s178
      %p180 = scmp.eq.s32.totalorder %s19, 0
      %p181 = por %p179, %p180
      %p182 = scmp.le.s32.totalorder 1, %s13
      %p183 = scmp.lt.s32.totalorder %s13, 9
      %p184 = pnand %p182, %p183
      %p185 = pneg %p184
      // Predicated region
      $region9: #{tpu_custom_call.1} parent=5 // pred_check
        _
      $region10: #{tpu_custom_call.1} parent=5 // pred_check_branch
        %187 = sbr.rel (%p184) target = $region12
      $region11: #{tpu_custom_call.1} parent=5 // pred_region
        %s188 = ssub.s32 %s13, 1
      $region12: #{tpu_custom_call.1} parent=5 // pred_fallthru
        _
      %p189 = scmp.lt.s32.totalorder %s13, 8
      // Predicated region
      $region13: #{tpu_custom_call.1} parent=5 // pred_check
        %p190 = pneg %p189
      $region14: #{tpu_custom_call.1} parent=5 // pred_check_branch
        %192 = sbr.rel (%p190) target = $region16
      $region15: #{tpu_custom_call.1} parent=5 // pred_region
        // Predicated region
        $region17: #{tpu_custom_call.1} parent=15 // pred_check
          %p193 = pneg %p54
        $region18: #{tpu_custom_call.1} parent=15 // pred_check_branch
          %195 = sbr.rel (%p193) target = $region20
        $region19: #{tpu_custom_call.1} parent=15 // pred_region
          %s196 = smul.u32 2, %s22
          %p197 = scmp.lt.s32.totalorder %s20, 1
          %s198 = scalar_select %p197, %s20, 1
          %p199 = scmp.lt.s32.totalorder %s196, 1
          %s200 = scalar_select %p199, %s196, 1
          %s201 = smul.addr %s198, 2
          %s202 = sadd.s32 %s200, %s201
          %s203 = smul.addr %s202, 8
          %s204 = scalar_lea.vmem %s0, %s203
          %s205 = smul.u32 2, %s22
        $region20: #{tpu_custom_call.1} parent=15 // pred_fallthru
          _
        // Predicated region
        $region21: #{tpu_custom_call.1} parent=15 // pred_check
          %p206 = pneg %p80
        $region22: #{tpu_custom_call.1} parent=15 // pred_check_branch
          %208 = sbr.rel (%p206) target = $region24
        $region23: #{tpu_custom_call.1} parent=15 // pred_region
          %p209 = scmp.lt.s32.totalorder %s20, 1
          %s210 = scalar_select %p209, %s20, 1
          %s211 = smul.addr %s210, 2
          %s212 = smul.addr %s211, 8
          %s213 = scalar_lea.vmem %s1, %s212
        $region24: #{tpu_custom_call.1} parent=15 // pred_fallthru
          _
        // Predicated region
        $region25: #{tpu_custom_call.1} parent=15 // pred_check
          %p214 = pneg %p110
        $region26: #{tpu_custom_call.1} parent=15 // pred_check_branch
          %216 = sbr.rel (%p214) target = $region28
        $region27: #{tpu_custom_call.1} parent=15 // pred_region
          %s217 = smul.u32 2, %s22
          %p218 = scmp.lt.s32.totalorder %s20, 1
          %s219 = scalar_select %p218, %s20, 1
          %p220 = scmp.lt.s32.totalorder %s21, 3
          %s221 = scalar_select %p220, %s21, 3
          %p222 = scmp.lt.s32.totalorder %s217, 1
          %s223 = scalar_select %p222, %s217, 1
          %s224 = smul.addr %s221, 2
          %s225 = sadd.s32 %s223, %s224
          %s226 = smul.addr %s219, 8
          %s227 = sadd.s32 %s225, %s226
          %s228 = smul.addr %s227, 8
          %s229 = scalar_lea.vmem %s2, %s228
          %s230 = smul.u32 2, %s22
        $region28: #{tpu_custom_call.1} parent=15 // pred_fallthru
          _
        // Predicated region
        $region29: #{tpu_custom_call.1} parent=15 // pred_check
          %p231 = pneg %p138
        $region30: #{tpu_custom_call.1} parent=15 // pred_check_branch
          %233 = sbr.rel (%p231) target = $region32
        $region31: #{tpu_custom_call.1} parent=15 // pred_region
          %p234 = scmp.lt.s32.totalorder %s20, 1
          %s235 = scalar_select %p234, %s20, 1
          %p236 = scmp.lt.s32.totalorder %s21, 3
          %s237 = scalar_select %p236, %s21, 3
          %s238 = smul.addr %s235, 4
          %s239 = sadd.s32 %s237, %s238
          %s240 = scalar_lea.vmem %s3, %s239
        $region32: #{tpu_custom_call.1} parent=15 // pred_fallthru
          _
      $region16: #{tpu_custom_call.1} parent=5 // pred_fallthru
        _
      %p241 = scmp.le.s32.totalorder 1, %s13
      %p242 = scmp.lt.s32.totalorder %s13, 9
      %p243 = pnand %p241, %p242
      %p244 = pneg %p243
      // Predicated region
      $region33: #{tpu_custom_call.1} parent=5 // pred_check
        _
      $region34: #{tpu_custom_call.1} parent=5 // pred_check_branch
        %246 = sbr.rel (%p243) target = $region36
      $region35: #{tpu_custom_call.1} parent=5 // pred_region
        %s247 = ssub.s32 %s13, 1
        %s248 = smul.u32 2, %s25
        %p249 = scmp.lt.s32.totalorder %s23, 1
        %s250 = scalar_select %p249, %s23, 1
        %p251 = scmp.lt.s32.totalorder %s248, 1
        %s252 = scalar_select %p251, %s248, 1
        %s253 = smul.addr %s250, 2
        %s254 = sadd.s32 %s252, %s253
        %s255 = smul.addr %s254, 8
        %s256 = scalar_lea.vmem %s0, %s255
        %p257 = pneg %p60
        %p258 = pneg %p57
        %p259 = scmp.lt.s32.totalorder %s23, 1
        %s260 = scalar_select %p259, %s23, 1
        %s261 = smul.addr %s260, 2
        %s262 = smul.addr %s261, 8
        %s263 = scalar_lea.vmem %s1, %s262
        %p264 = pneg %p86
        %p265 = pneg %p83
        %s266 = smul.u32 2, %s25
        %p267 = scmp.lt.s32.totalorder %s23, 1
        %s268 = scalar_select %p267, %s23, 1
        %p269 = scmp.lt.s32.totalorder %s24, 3
        %s270 = scalar_select %p269, %s24, 3
        %p271 = scmp.lt.s32.totalorder %s266, 1
        %s272 = scalar_select %p271, %s266, 1
        %s273 = smul.addr %s270, 2
        %s274 = sadd.s32 %s272, %s273
        %s275 = smul.addr %s268, 8
        %s276 = sadd.s32 %s274, %s275
        %s277 = smul.addr %s276, 8
        %s278 = scalar_lea.vmem %s2, %s277
        %p279 = pneg %p116
        %p280 = pneg %p113
        %p281 = scmp.lt.s32.totalorder %s23, 1
        %s282 = scalar_select %p281, %s23, 1
        %p283 = scmp.lt.s32.totalorder %s24, 3
        %s284 = scalar_select %p283, %s24, 3
        %s285 = smul.addr %s282, 4
        %s286 = sadd.s32 %s284, %s285
        %s287 = scalar_lea.vmem %s3, %s286
        %p288 = pneg %p144
        %p289 = pneg %p141
        %p290 = pneg %p174
        %p291 = pneg %p171
        %s292 = sand.u32 %s161, 1
        %s293 = scalar_lea.sflag [#allocation3], %s292
        %s294 = sand.u32 %s161, 1
        %s295 = smul.addr %s294, 16
        %s296 = scalar_lea.vmem [#allocation2], %s295
        %s297 = smul.u32 2, %s25
        %p298 = scmp.lt.s32.totalorder %s23, 1
        %s299 = scalar_select %p298, %s23, 1
        %p300 = scmp.lt.s32.totalorder %s297, 1
        %s301 = scalar_select %p300, %s297, 1
        %s302 = smul.addr %s299, 2
        %s303 = sadd.s32 %s301, %s302
        %s304 = smul.addr %s303, 8
        %s305 = scalar_lea.vmem %s0, %s304
        %s306 = smul.u32 2, %s25
        %p307 = scmp.lt.s32.totalorder %s23, 1
        %s308 = scalar_select %p307, %s23, 1
        %s309 = smul.addr %s308, 2
        %s310 = smul.addr %s309, 8
        %s311 = scalar_lea.vmem %s1, %s310
        %s312 = smul.u32 2, %s25
        %p313 = scmp.lt.s32.totalorder %s23, 1
        %s314 = scalar_select %p313, %s23, 1
        %p315 = scmp.lt.s32.totalorder %s24, 3
        %s316 = scalar_select %p315, %s24, 3
        %p317 = scmp.lt.s32.totalorder %s312, 1
        %s318 = scalar_select %p317, %s312, 1
        %s319 = smul.addr %s316, 2
        %s320 = sadd.s32 %s318, %s319
        %s321 = smul.addr %s314, 8
        %s322 = sadd.s32 %s320, %s321
        %s323 = smul.addr %s322, 8
        %s324 = scalar_lea.vmem %s2, %s323
        %s325 = smul.u32 2, %s25
        %p326 = scmp.lt.s32.totalorder %s23, 1
        %s327 = scalar_select %p326, %s23, 1
        %p328 = scmp.lt.s32.totalorder %s24, 3
        %s329 = scalar_select %p328, %s24, 3
        %s330 = smul.addr %s327, 4
        %s331 = sadd.s32 %s329, %s330
        %s332 = scalar_lea.vmem %s3, %s331
        %s333 = smul.u32 2, %s25
        %v334 = vld [vmem:[%s305] sm:$0xff]
        %v335 = vld [vmem:[%s305 + $0x8] sm:$0xff]
        %v336 = vld [vmem:[%s311] sm:$0xff]
        %v337 = vld [vmem:[%s311 + $0x8] sm:$0xff]
        %v338 = vld [vmem:[%s324] sm:$0xff]
        %v339 = vld [vmem:[%s324 + $0x8] sm:$0xff]
        %341 = vset.pattern.permute.xlu0 0
        %342 = vperm.xlu0 %341, %v338
        %v343 = vpop.permute.xlu0 %342
        %346 = vset.pattern.permute.xlu0 0
        %347 = vperm.xlu0 %346, %v339
        %v348 = vpop.permute.xlu0 %347
        %vm350 = vcmask 130048
        %v352 = vsel %vm350, %v334, 0
        %v355 = vsel %vm350, %v335, 0
        %357 = vmatprep.subr.mxu0 0.0
        %358 = vmatpush1.msra.mxu0 %v336
        %359 = vmatprep.subr.mxu0 0.0
        %360 = vmatpush1.msra.mxu0 %v337
        %361 = vmatprep.subr.mxu0 0.0
        %362 = vmatpush1.msra.mxu0 0.0
        %363 = vmatprep.subr.mxu0 0.0
        %364 = vmatpush1.msra.mxu0 0.0
        %365 = vmatprep.subr.mxu0 0.0
        %366 = vmatpush1.msra.mxu0 0.0
        %367 = vmatprep.subr.mxu0 0.0
        %368 = vmatpush1.msra.mxu0 0.0
        %369 = vmatprep.subr.mxu0 0.0
        %370 = vmatpush1.msra.mxu0 0.0
        %371 = vmatprep.subr.mxu0 0.0
        %372 = vmatpush1.msra.mxu0 0.0
        %373 = vmatprep.subr.mxu0 0.0
        %374 = vmatpush1.msra.mxu0 0.0
        %375 = vmatprep.subr.mxu0 0.0
        %376 = vmatpush1.msra.mxu0 0.0
        %377 = vmatprep.subr.mxu0 0.0
        %378 = vmatpush1.msra.mxu0 0.0
        %379 = vmatprep.subr.mxu0 0.0
        %380 = vmatpush1.msra.mxu0 0.0
        %381 = vmatprep.subr.mxu0 0.0
        %382 = vmatpush1.msra.mxu0 0.0
        %383 = vmatprep.subr.mxu0 0.0
        %384 = vmatpush1.msra.mxu0 0.0
        %385 = vmatprep.subr.mxu0 0.0
        %386 = vmatpush1.msra.mxu0 0.0
        %387 = vmatprep.subr.mxu0 0.0
        %388 = vmatpush1.msra.mxu0 0.0
        %389 = vmatprep.subr.mxu0 0.0
        %390 = vmatpush1.msra.mxu0 0.0
        %391 = vmatprep.subr.mxu0 0.0
        %392 = vmatpush1.msra.mxu0 0.0
        %393 = vmatprep.subr.mxu0 0.0
        %394 = vmatpush1.msra.mxu0 0.0
        %395 = vmatprep.subr.mxu0 0.0
        %396 = vmatpush1.msra.mxu0 0.0
        %397 = vmatprep.subr.mxu0 0.0
        %398 = vmatpush1.msra.mxu0 0.0
        %399 = vmatprep.subr.mxu0 0.0
        %400 = vmatpush1.msra.mxu0 0.0
        %401 = vmatprep.subr.mxu0 0.0
        %402 = vmatpush1.msra.mxu0 0.0
        %403 = vmatprep.subr.mxu0 0.0
        %404 = vmatpush1.msra.mxu0 0.0
        %405 = vmatprep.subr.mxu0 0.0
        %406 = vmatpush1.msra.mxu0 0.0
        %407 = vmatprep.subr.mxu0 0.0
        %408 = vmatpush1.msra.mxu0 0.0
        %409 = vmatprep.subr.mxu0 0.0
        %410 = vmatpush1.msra.mxu0 0.0
        %411 = vmatprep.subr.mxu0 0.0
        %412 = vmatpush1.msra.mxu0 0.0
        %413 = vmatprep.subr.mxu0 0.0
        %414 = vmatpush1.msra.mxu0 0.0
        %415 = vmatprep.subr.mxu0 0.0
        %416 = vmatpush1.msra.mxu0 0.0
        %417 = vmatprep.subr.mxu0 0.0
        %418 = vmatpush1.msra.mxu0 0.0
        %419 = vmatprep.subr.mxu0 0.0
        %420 = vmatpush1.msra.mxu0 0.0
        %421 = vmatprep.mubr.f32.mxu0 0.0
        %422 = vmatmul.mubr.f32.gmra.mrb[0].mxu0 %v352
        %v423 = vpop.f32.mrb[0].mxu0
        %v424 = vadd.f32 %v343, %v423
        %v425 = vpop.f32.mrb[0].mxu0
        %426 = vmatprep.mubr.f32.mxu0 0.0
        %427 = vmatmul.mubr.f32.gmra.mrb[0].mxu0 %v355
        %v428 = vpop.f32.mrb[0].mxu0
        %v429 = vadd.f32 %v348, %v428
        %v430 = vpop.f32.mrb[0].mxu0
        %431 = vdwg.mxu0
        %v432 = vld [vmem:[%s332] sm:$0x1]
        %v434 = vlaneseq
        %v435 = vshrl.u32 %v434, 7
        %v436 = vsub.s32 0, %v435
        %v437 = vrot.slane %v432, %v436
        %v439 = vadd.f32 %v424, %v437
        %v440 = vadd.f32 %v429, %v437
        %s441 = smul.u32 %s25, 16
        %v442 = vlaneseq
        %v443 = vshrl.u32 %v442, 7
        %v444 = vadd.s32 %v443, 8
        %v445 = vstv %s441
        %v446 = vadd.s32 %v445, %v443
        %v447 = vadd.s32 %v445, %v444
        %v448 = vlaneseq
        %v449 = vand.u32 %v448, 127
        %vm450 = vcmp.gt.s32.totalorder %v446, %v449
        %vm451 = vcmp.gt.s32.totalorder %v447, %v449
        %v452 = vsub.f32 %v439, 1e+12
        %v453 = vsub.f32 %v440, 1e+12
        %v454 = vsel %vm450, %v452, %v439
        %v455 = vsel %vm451, %v453, %v440
        %456 = vst [vmem:[%s296] sm:$0xff] %v454
        %457 = vst [vmem:[%s296 + $0x8] sm:$0xff] %v455
        %s458 = sand.u32 %s161, 1
        %s459 = scalar_lea.sflag [#allocation3], %s458
        %s460 = sand.u32 %s161, 1
        %s461 = smul.addr %s460, 16
        %s462 = scalar_lea.vmem [#allocation2], %s461
        // Predicated region
        $region37: #{tpu_custom_call.1} parent=35 // pred_check
          %p463 = pneg %p171
        $region38: #{tpu_custom_call.1} parent=35 // pred_check_branch
          %465 = sbr.rel (%p463) target = $region40
        $region39: #{tpu_custom_call.1} parent=35 // pred_region
          %s466 = smul.u32 2, %s25
          %s468 = ssub.s32 256, 256
          %469 = vsyncadd %s459, %s468
          %s470 = smul.addr %s24, 2
          %s471 = sadd.s32 %s466, %s470
          %s472 = smul.addr %s23, 8
          %s473 = sadd.s32 %s471, %s472
          %s474 = smul.addr %s473, 128
          %s475 = scalar_lea.hbm %s4, %s474
          %s476 = sshll.u32 %s462, 4
          %s477 = int_to_ptr.vmem [resolvable:$true] %s476
          %482 = dma.vmem_to_hbm [thread:$0]  %s477, 256, %s475, %s459, 128, 128, 8
        $region40: #{tpu_custom_call.1} parent=35 // pred_fallthru
          _
      $region36: #{tpu_custom_call.1} parent=5 // pred_fallthru
        _
      %p483 = scmp.le.s32.totalorder 2, %s13
      // Predicated region
      $region41: #{tpu_custom_call.1} parent=5 // pred_check
        %p484 = pneg %p483
      $region42: #{tpu_custom_call.1} parent=5 // pred_check_branch
        %486 = sbr.rel (%p484) target = $region44
      $region43: #{tpu_custom_call.1} parent=5 // pred_region
        %s487 = ssub.s32 %s13, 2
        // Predicated region
        $region45: #{tpu_custom_call.1} parent=43 // pred_check
          %p488 = pneg %p177
        $region46: #{tpu_custom_call.1} parent=43 // pred_check_branch
          %490 = sbr.rel (%p488) target = $region48
        $region47: #{tpu_custom_call.1} parent=43 // pred_region
          %s491 = sand.u32 %s162, 1
          %s492 = scalar_lea.sflag [#allocation3], %s491
          %s493 = sand.u32 %s162, 1
          %s494 = smul.addr %s493, 16
          %s495 = scalar_lea.vmem [#allocation2], %s494
          %496 = dma.done %s492, 256
        $region48: #{tpu_custom_call.1} parent=43 // pred_fallthru
          _
      $region44: #{tpu_custom_call.1} parent=5 // pred_fallthru
        _
    $region6: #{tpu_custom_call.1} parent=1 // loop_footer
      %s17 = sadd.s32 1, %s13
    $region7: #{tpu_custom_call.1} parent=1 // loop_footer_branch
      %12 = sbr.rel target = $region3
    $region8: #{tpu_custom_call.1} parent=1 // loop_exit
      _
    %497 = vsyncpa [#allocation3], 1
    %s498 = scalar_lea.sflag [#allocation3], 1
    %499 = vsyncpa %s498, 1

</llo_original>
